<compile_context>
chip_gen: v7x
topology: tpu7x:2x2x1
jax: 0.10.0
libtpu: 0.0.40
codegen_flags: <defaults>
</compile_context>

<pallas_src>
import math
import functools

import jax
import jax.numpy as jnp
from jax import lax
from jax.experimental import pallas as pl
from jax.experimental.pallas import tpu as pltpu


_LANE = 128
_SUBLANE = 8


def _round_up(a, b):
    return (a + b - 1) // b * b


def _layernorm_store(h, g_ref, beta_ref, o_ref, eps):
    """h: [tm, d] f32. LayerNorm over the last (lane) axis + affine, cast, store."""
    mean = jnp.mean(h, axis=-1, keepdims=True)
    c = h - mean
    var = jnp.mean(c * c, axis=-1, keepdims=True)
    inv = lax.rsqrt(var + eps)
    o_ref[...] = (c * inv * g_ref[...].astype(jnp.float32)
                  + beta_ref[...].astype(jnp.float32)).astype(o_ref.dtype)


# -----------------------------------------------------------------------------
# Path A: weight resident in VMEM (single K step; grid over M tiles only).
# -----------------------------------------------------------------------------
def _resident_kernel(x_ref, w_ref, b_ref, g_ref, beta_ref, o_ref, *, eps):
    xf = x_ref[...].astype(jnp.float32)
    y = jnp.dot(x_ref[...], w_ref[...], preferred_element_type=jnp.float32)
    # dropout = identity at inference; bias + residual, then LayerNorm in f32.
    h = xf + y + b_ref[...].astype(jnp.float32)
    _layernorm_store(h, g_ref, beta_ref, o_ref, eps)


# -----------------------------------------------------------------------------
# Path B: K-streamed weight with an f32 VMEM accumulator.
# -----------------------------------------------------------------------------
def _ktiled_kernel(x_ref, w_ref, b_ref, g_ref, beta_ref, o_ref, acc_ref, *,
                   eps, tk, d):
    k = pl.program_id(1)

    @pl.when(k == 0)
    def _():
        acc_ref[...] = jnp.zeros_like(acc_ref)

    xf = x_ref[...].astype(jnp.float32)
    # Fold the residual into the accumulator: this x column tile maps 1:1 onto
    # output columns [k*tk, (k+1)*tk) because the layer is square (N == K).
    # Eliminates the second HBM read of x; the extra add is VALU filler under
    # an MXU/HBM-bound loop.
    if tk == d:
        acc_ref[...] += xf
    else:
        col = pl.multiple_of(k * tk, _LANE)
        acc_ref[:, pl.ds(col, tk)] += xf

    acc_ref[...] += jnp.dot(x_ref[...], w_ref[...],
                            preferred_element_type=jnp.float32)

    @pl.when(k == pl.num_programs(1) - 1)
    def _():
        h = acc_ref[...] + b_ref[...].astype(jnp.float32)
        _layernorm_store(h, g_ref, beta_ref, o_ref, eps)


# -----------------------------------------------------------------------------
# Per-generation tiling / VMEM planning.
# -----------------------------------------------------------------------------
def _vmem_budget_bytes():
    """VMEM budget (also requested as vmem_limit_bytes), derived per chip."""
    phys = 0
    try:
        phys = int(getattr(pltpu.get_tpu_info(), "vmem_capacity_bytes", 0) or 0)
    except Exception:
        phys = 0
    if phys <= 0:
        phys = 64 * 1024 * 1024          # conservative default = v7x physical VMEM
    # Leave ~25% headroom for Mosaic internal scratch / semaphores.
    return int(min(phys * 3 // 4, 100 * 1024 * 1024))


def _plan_tiles(m, d, x_bytes, w_bytes, out_bytes, budget):
    """Pick (tm, tk, weight_resident) within the VMEM budget (all operands
    counted with 2x pipeline buffers)."""
    m8 = _round_up(max(m, 1), _SUBLANE)

    # Largest MXU-friendly row tile that does not exceed the padded row count.
    tm = _SUBLANE
    for cand in (512, 256, 128, 64, 32, 16, 8):
        if cand <= m8:
            tm = cand
            break
    # v7x has 2 TensorCores: ensure the "parallel" M axis has >= 2 blocks
    # whenever possible so the grid can be sharded across both.
    while tm > _SUBLANE and pl.cdiv(m8, tm) < 2:
        tm //= 2

    small = 6 * d * 4                               # bias/gamma/beta (2 bufs each)

    def resident_need(tm_):
        return (2 * d * d * w_bytes                 # weight (constant index, 2 bufs)
                + 2 * tm_ * d * x_bytes             # x row tiles
                + 2 * tm_ * d * out_bytes           # output tiles
                + small)

    def streamed_need(tm_, tk_):
        return (2 * tk_ * d * w_bytes               # weight K tiles
                + 2 * tm_ * tk_ * x_bytes           # x K tiles
                + 2 * tm_ * d * out_bytes           # output tiles
                + tm_ * d * 4                       # f32 accumulator scratch
                + small)

    # Prefer the resident-weight layout (weight DMA'd from HBM exactly once);
    # allow shrinking tm (not below 64) to make it fit, since removing the
    # weight re-stream dominates.
    tm_res = tm
    while True:
        if resident_need(tm_res) <= budget:
            return tm_res, d, True
        if tm_res <= 64:
            break
        tm_res //= 2

    # K-streamed fallback: largest tk (then tm) that fits.
    tks = [t for t in (512, 256, 128) if d % t == 0] or [d]
    tm_try = tm
    while True:
        for tk in tks:
            if streamed_need(tm_try, tk) <= budget:
                return tm_try, tk, False
        if tm_try <= _SUBLANE:
            break
        tm_try //= 2
    # Last resort: smallest tiles (compiler will reject if it truly can't fit).
    return _SUBLANE, tks[-1], False


# -----------------------------------------------------------------------------
# Wrapper.
# -----------------------------------------------------------------------------
def residual_block_forward(x, w_kn, bias, gamma, beta, *, eps=1e-5):
    """LayerNorm(x + x @ w_kn + bias)  ==  ResidualBlock(layer=Linear) in eval mode.

    x: [..., embed_dim] (f32 or bf16); w_kn: [embed_dim, embed_dim] stored
    as [in, out] (pre-transposed Linear weight); bias/gamma/beta: [embed_dim].
    """
    orig_shape = x.shape
    d = orig_shape[-1]
    assert w_kn.shape == (d, d), (
        "inner layer must map embed_dim -> embed_dim (square); the residual "
        "fold in the K-streamed path relies on N == K")
    assert d % _LANE == 0, "embed_dim must be a multiple of 128 (lane-dense output)"

    x2d = x.reshape(-1, d)
    m = x2d.shape[0]

    budget = _vmem_budget_bytes()
    tm, tk, resident = _plan_tiles(
        m, d,
        x_bytes=x2d.dtype.itemsize,
        w_bytes=w_kn.dtype.itemsize,
        out_bytes=x2d.dtype.itemsize,
        budget=budget)

    m_pad = _round_up(m, tm)
    if m_pad != m:
        x2d = jnp.pad(x2d, ((0, m_pad - m), (0, 0)))

    b2d = bias.reshape(1, d)
    g2d = gamma.reshape(1, d)
    beta2d = beta.reshape(1, d)

    if resident:
        grid = (m_pad // tm,)
        kernel = functools.partial(_resident_kernel, eps=eps)
        in_specs = [
            pl.BlockSpec((tm, d), lambda i: (i, 0)),   # x (read once per row)
            pl.BlockSpec((d, d), lambda i: (0, 0)),    # weight, VMEM-resident
            pl.BlockSpec((1, d), lambda i: (0, 0)),    # bias
            pl.BlockSpec((1, d), lambda i: (0, 0)),    # gamma
            pl.BlockSpec((1, d), lambda i: (0, 0)),    # beta
        ]
        out_specs = pl.BlockSpec((tm, d), lambda i: (i, 0))
        scratch_shapes = []
        dims = ("parallel",)
    else:
        grid = (m_pad // tm, d // tk)                  # reduction axis last
        kernel = functools.partial(_ktiled_kernel, eps=eps, tk=tk, d=d)
        in_specs = [
            pl.BlockSpec((tm, tk), lambda i, k: (i, k)),   # x (read once)
            pl.BlockSpec((tk, d), lambda i, k: (k, 0)),    # weight [K, N]
            pl.BlockSpec((1, d), lambda i, k: (0, 0)),     # bias
            pl.BlockSpec((1, d), lambda i, k: (0, 0)),     # gamma
            pl.BlockSpec((1, d), lambda i, k: (0, 0)),     # beta
        ]
        out_specs = pl.BlockSpec((tm, d), lambda i, k: (i, 0))
        scratch_shapes = [pltpu.VMEM((tm, d), jnp.float32)]
        dims = ("parallel", "arbitrary")

    # NOTE: bias/gamma/beta (and the resident weight) have constant index maps,
    # so they are DMA'd only once; pipeline_mode=pl.Buffered(1) would also halve
    # their (small) VMEM footprint but is skipped to keep the lowering
    # conservative — the 2x buffers are accounted for in _plan_tiles instead.
    out = pl.pallas_call(
        kernel,
        out_shape=jax.ShapeDtypeStruct((m_pad, d), x.dtype),
        grid_spec=pltpu.PrefetchScalarGridSpec(
            num_scalar_prefetch=0,
            grid=grid,
            in_specs=in_specs,
            out_specs=out_specs,
            scratch_shapes=scratch_shapes,
        ),
        compiler_params=pltpu.CompilerParams(
            dimension_semantics=dims,
            vmem_limit_bytes=int(budget)),
    )(x2d, w_kn, b2d, g2d, beta2d)

    return out[:m].reshape(orig_shape)


def init_params(key, embed_dim, dtype=jnp.float32):
    """nn.Linear-style init; weight stored pre-transposed as [in, out].
    Pass dtype=jnp.bfloat16 to halve HBM traffic (accumulation stays f32)."""
    kw, kb = jax.random.split(key)
    bound = 1.0 / math.sqrt(embed_dim)
    w_kn = jax.random.uniform(kw, (embed_dim, embed_dim), dtype, -bound, bound)
    bias = jax.random.uniform(kb, (embed_dim,), dtype, -bound, bound)
    gamma = jnp.ones((embed_dim,), dtype)   # nn.LayerNorm default weight
    beta = jnp.zeros((embed_dim,), dtype)   # nn.LayerNorm default bias
    return w_kn, bias, gamma, beta


if __name__ == "__main__":
    batch, seq_len, embed_dim, num_head = 2, 8, 128, 4

    key = jax.random.PRNGKey(0)
    kx, kp = jax.random.split(key)

    x = jax.random.normal(kx, (batch, seq_len, embed_dim), dtype=jnp.float32)
    w_kn, bias, gamma, beta = init_params(kp, embed_dim)

    out = residual_block_forward(x, w_kn, bias, gamma, beta)
    out = jax.block_until_ready(out)

    # Plain-JAX reference (dropout = identity in eval mode).
    x2d = x.reshape(-1, embed_dim)
    y = x2d @ w_kn + bias
    h = x2d + y
    mean = h.mean(-1, keepdims=True)
    var = ((h - mean) ** 2).mean(-1, keepdims=True)
    ref = ((h - mean) / jnp.sqrt(var + 1e-5)) * gamma + beta
    ref = ref.reshape(x.shape)

    assert out.shape == x.shape
    assert jnp.allclose(out, ref, atol=1e-4, rtol=1e-4), float(
        jnp.max(jnp.abs(out - ref)))

    print("KERNEL_OK")
</pallas_src>

<mosaic_0001>
module attributes {stable_mosaic.version = 11 : i64} {
  func.func @_resident_kernel(%arg0: i32, %arg1: memref<8x128xf32, #tpu.memory_space<vmem>>, %arg2: memref<128x128xf32, #tpu.memory_space<vmem>>, %arg3: memref<1x128xf32, #tpu.memory_space<vmem>>, %arg4: memref<1x128xf32, #tpu.memory_space<vmem>>, %arg5: memref<1x128xf32, #tpu.memory_space<vmem>>, %arg6: memref<8x128xf32, #tpu.memory_space<vmem>>) attributes {dimension_semantics = [#tpu.dimension_semantics<parallel>], iteration_bounds = array<i64: 2>, scalar_prefetch = 0 : i64, scratch_operands = 0 : i64, tpu.core_type = #tpu.core_type<tc>, window_params = [{transform_indices = @transform_0, window_bounds = array<i64: 8, 128>}, {pipeline_mode = #tpu.pipeline_mode<synchronous>, transform_indices = @transform_1, window_bounds = array<i64: 128, 128>}, {pipeline_mode = #tpu.pipeline_mode<synchronous>, transform_indices = @transform_2, window_bounds = array<i64: 1, 128>}, {pipeline_mode = #tpu.pipeline_mode<synchronous>, transform_indices = @transform_3, window_bounds = array<i64: 1, 128>}, {pipeline_mode = #tpu.pipeline_mode<synchronous>, transform_indices = @transform_4, window_bounds = array<i64: 1, 128>}, {transform_indices = @transform_5, window_bounds = array<i64: 8, 128>}]} {
    %c0 = arith.constant 0 : index
    %c0_0 = arith.constant 0 : index
    %0 = vector.load %arg1[%c0, %c0_0] : memref<8x128xf32, #tpu.memory_space<vmem>>, vector<8x128xf32>
    %c0_1 = arith.constant 0 : index
    %c0_2 = arith.constant 0 : index
    %1 = vector.load %arg1[%c0_1, %c0_2] : memref<8x128xf32, #tpu.memory_space<vmem>>, vector<8x128xf32>
    %c0_3 = arith.constant 0 : index
    %c0_4 = arith.constant 0 : index
    %2 = vector.load %arg2[%c0_3, %c0_4] : memref<128x128xf32, #tpu.memory_space<vmem>>, vector<128x128xf32>
    %cst = arith.constant dense<0.000000e+00> : vector<8x128xf32>
    %3 = tpu.matmul %1, %2, %cst {dimension_numbers = #tpu.dot_dimension_numbers<[1], [0], [0], [1], [0, 0, 1, 1], [], []>} : vector<8x128xf32>, vector<128x128xf32>, vector<8x128xf32> -> vector<8x128xf32>
    %4 = arith.addf %0, %3 : vector<8x128xf32>
    %c0_5 = arith.constant 0 : index
    %c0_6 = arith.constant 0 : index
    %5 = vector.load %arg3[%c0_5, %c0_6] : memref<1x128xf32, #tpu.memory_space<vmem>>, vector<1x128xf32>
    %6 = vector.broadcast %5 : vector<1x128xf32> to vector<8x128xf32>
    %7 = arith.addf %4, %6 : vector<8x128xf32>
    %cst_7 = arith.constant dense<0.000000e+00> : vector<8xf32>
    %8 = vector.multi_reduction <add>, %7, %cst_7 [1] : vector<8x128xf32> to vector<8xf32>
    %9 = vector.shape_cast %8 : vector<8xf32> to vector<8x1xf32>
    %cst_8 = arith.constant 1.280000e+02 : f32
    %10 = vector.broadcast %cst_8 : f32 to vector<8x1xf32>
    %11 = arith.divf %9, %10 : vector<8x1xf32>
    %12 = vector.broadcast %11 : vector<8x1xf32> to vector<8x128xf32>
    %13 = arith.subf %7, %12 : vector<8x128xf32>
    %14 = arith.mulf %13, %13 : vector<8x128xf32>
    %cst_9 = arith.constant dense<0.000000e+00> : vector<8xf32>
    %15 = vector.multi_reduction <add>, %14, %cst_9 [1] : vector<8x128xf32> to vector<8xf32>
    %16 = vector.shape_cast %15 : vector<8xf32> to vector<8x1xf32>
    %cst_10 = arith.constant 1.280000e+02 : f32
    %17 = vector.broadcast %cst_10 : f32 to vector<8x1xf32>
    %18 = arith.divf %16, %17 : vector<8x1xf32>
    %cst_11 = arith.constant 9.99999974E-6 : f32
    %19 = vector.broadcast %cst_11 : f32 to vector<8x1xf32>
    %20 = arith.addf %18, %19 : vector<8x1xf32>
    %21 = math.rsqrt %20 : vector<8x1xf32>
    %22 = vector.broadcast %21 : vector<8x1xf32> to vector<8x128xf32>
    %23 = arith.mulf %13, %22 : vector<8x128xf32>
    %c0_12 = arith.constant 0 : index
    %c0_13 = arith.constant 0 : index
    %24 = vector.load %arg4[%c0_12, %c0_13] : memref<1x128xf32, #tpu.memory_space<vmem>>, vector<1x128xf32>
    %25 = vector.broadcast %24 : vector<1x128xf32> to vector<8x128xf32>
    %26 = arith.mulf %23, %25 : vector<8x128xf32>
    %c0_14 = arith.constant 0 : index
    %c0_15 = arith.constant 0 : index
    %27 = vector.load %arg5[%c0_14, %c0_15] : memref<1x128xf32, #tpu.memory_space<vmem>>, vector<1x128xf32>
    %28 = vector.broadcast %27 : vector<1x128xf32> to vector<8x128xf32>
    %29 = arith.addf %26, %28 : vector<8x128xf32>
    %c0_16 = arith.constant 0 : index
    %c0_17 = arith.constant 0 : index
    %30 = vector.load %arg6[%c0_16, %c0_17] : memref<8x128xf32, #tpu.memory_space<vmem>>, vector<8x128xf32>
    tpu.vector_store %arg6[%c0_16, %c0_17], %29 {strides = array<i32>} : memref<8x128xf32, #tpu.memory_space<vmem>>, vector<8x128xf32>,
    return
  }
  func.func @transform_0(%arg0: i32) -> (i32, i32) {
    %c0_i32 = arith.constant 0 : i32
    %c0_i32_0 = arith.constant 0 : i32
    return %arg0, %c0_i32 : i32, i32
  }
  func.func @transform_1(%arg0: i32) -> (i32, i32) {
    %c0_i32 = arith.constant 0 : i32
    %c0_i32_0 = arith.constant 0 : i32
    %c0_i32_1 = arith.constant 0 : i32
    return %c0_i32, %c0_i32_0 : i32, i32
  }
  func.func @transform_2(%arg0: i32) -> (i32, i32) {
    %c0_i32 = arith.constant 0 : i32
    %c0_i32_0 = arith.constant 0 : i32
    %c0_i32_1 = arith.constant 0 : i32
    return %c0_i32, %c0_i32_0 : i32, i32
  }
  func.func @transform_3(%arg0: i32) -> (i32, i32) {
    %c0_i32 = arith.constant 0 : i32
    %c0_i32_0 = arith.constant 0 : i32
    %c0_i32_1 = arith.constant 0 : i32
    return %c0_i32, %c0_i32_0 : i32, i32
  }
  func.func @transform_4(%arg0: i32) -> (i32, i32) {
    %c0_i32 = arith.constant 0 : i32
    %c0_i32_0 = arith.constant 0 : i32
    %c0_i32_1 = arith.constant 0 : i32
    return %c0_i32, %c0_i32_0 : i32, i32
  }
  func.func @transform_5(%arg0: i32) -> (i32, i32) {
    %c0_i32 = arith.constant 0 : i32
    %c0_i32_0 = arith.constant 0 : i32
    return %arg0, %c0_i32 : i32, i32
  }
}

</mosaic_0001>

<llo_original>
// kernel: tpu_custom_call.1
$region0: #{tpu_custom_call.1}
  #allocation0 [shape = 'u32[]', space=smem, size = 0x4, offset = 0x4, fixed_abs, tag = 'smem constant byte address 0x4 - core index']
  #allocation1 [shape = 'u32[144,128]{1,0:T(1,128)}', space=vmem, size = 0x12000, scoped, tag = 'internal scratch']
  %s0 = inlined_call_operand.hbm [shape: f32[16,128], index: 0, kind: input, shape index: {}]
  %s1 = inlined_call_operand.hbm [shape: f32[128,128], index: 1, kind: input, shape index: {}]
  %s2 = inlined_call_operand.vmem [shape: f32[1,128], index: 2, kind: input, shape index: {}]
  %s3 = inlined_call_operand.vmem [shape: f32[1,128], index: 3, kind: input, shape index: {}]
  %s4 = inlined_call_operand.vmem [shape: f32[1,128], index: 4, kind: input, shape index: {}]
  %s5 = inlined_call_operand.hbm [shape: f32[16,128], index: 5, kind: output, shape index: {}]
  %s6 = sld [smem:[#allocation0]]
  $region61: #{tpu_custom_call.1} parent=0
    _
  %s8 = ssub.s32 1, %s6
  %s9 = scalar_select 0, %s8, %s6
  $region1: #{tpu_custom_call.1} parent=0
    #allocation2 [shape = 'u8[8192]{0}', space=vmem, size = 0x2000, scoped, tag = 'input window, operand 0']
    #allocation3 [shape = 's32[2]{0}', space=sflag, size = 0x8, scoped, tag = 'scoped memory for tpu_custom_call.1']
    #allocation4 [shape = 's32[2]{0}', space=sflag, size = 0x8, scoped, tag = 'scoped memory for tpu_custom_call.1']
    #allocation5 [shape = 'u8[65536]{0}', space=vmem, size = 0x10000, scoped, tag = 'input window, operand 1, single buffered']
    #allocation6 [shape = 's32[1]{0}', space=sflag, size = 0x4, scoped, tag = 'scoped memory for tpu_custom_call.1']
    #allocation7 [shape = 'u8[8192]{0}', space=vmem, size = 0x2000, scoped, tag = 'output window, operand 0']
    %10 = vsyncpa [#allocation3], 0
    %s11 = scalar_lea.sflag [#allocation3], 1
    %12 = vsyncpa %s11, 0
    %13 = vsyncpa [#allocation6], 0
    %14 = vsyncpa [#allocation4], 0
    %s15 = scalar_lea.sflag [#allocation4], 1
    %16 = vsyncpa %s15, 0
    loop: start=0, step=1, limit=4
    $region2: #{tpu_custom_call.1} parent=1 // loop_pre_header
      _
    $region3: #{tpu_custom_call.1} parent=1 // loop_header
      %s18 = sphi 0, %s22
      %p19 = scmp.ge.s32.totalorder %s18, 4
      %s28 = sphi 0, %s30
      %s31 = sphi 0, %s28
      %s32 = sphi 0, %s31
      %s48 = sphi 0, %s32
      %s52 = sphi 0, %s52
      %s54 = sphi 0, %s52
      %s55 = sphi 0, %s54
      %s69 = sphi 0, %s55
      %s73 = sphi 0, %s73
      %s75 = sphi 0, %s73
      %s76 = sphi 0, %s75
      %s90 = sphi 0, %s76
      %s94 = sphi 0, %s94
      %s96 = sphi 0, %s94
      %s97 = sphi 0, %s96
      %s111 = sphi 0, %s97
      %s115 = sphi 0, %s115
      %s117 = sphi 0, %s115
      %s118 = sphi 0, %s117
      %s132 = sphi 0, %s118
      %s138 = sphi 0, %s140
      %s141 = sphi 0, %s138
      %s142 = sphi 0, %s141
      %s158 = sphi 0, %s142
    $region4: #{tpu_custom_call.1} parent=1 // loop_header_branch
      %21 = sbr.rel (%p19) target = $region8
    $region5: #{tpu_custom_call.1} parent=1 // loop_body
      %s23 = ssub.s32 %s18, 1
      %s24 = ssub.s32 %s18, 2
      %s25 = sadd.s32 %s18, 1
      %s26 = ssub.s32 %s18, %s25
      %p27 = scmp.eq.s32.totalorder %s26, 0
      %s29 = sadd.s32 %s28, 1
      %s30 = scalar_select %p27, %s28, %s29
      %p33 = pneg %p27
      %p34 = scmp.eq.s32.totalorder %s18, 1
      %p35 = por %p33, %p34
      %p36 = scmp.ne.s32.totalorder %s28, %s31
      %p37 = scmp.eq.s32.totalorder %s18, 0
      %p38 = por %p36, %p37
      %p39 = scmp.ne.s32.totalorder %s28, %s31
      %p40 = scmp.eq.s32.totalorder %s23, 1
      %p41 = por %p39, %p40
      %p42 = scmp.ne.s32.totalorder %s31, %s32
      %p43 = scmp.eq.s32.totalorder %s23, 0
      %p44 = por %p42, %p43
      %p45 = scmp.ne.s32.totalorder %s31, %s32
      %p46 = scmp.eq.s32.totalorder %s24, 1
      %p47 = por %p45, %p46
      %p49 = scmp.ne.s32.totalorder %s32, %s48
      %p50 = scmp.eq.s32.totalorder %s24, 0
      %p51 = por %p49, %p50
      %s53 = sadd.s32 %s52, 1
      %p56 = scmp.eq.s32.totalorder %s18, 1
      %p57 = scmp.ne.s32.totalorder %s52, %s54
      %p58 = scmp.eq.s32.totalorder %s18, 0
      %p59 = por %p57, %p58
      %p60 = scmp.ne.s32.totalorder %s52, %s54
      %p61 = scmp.eq.s32.totalorder %s23, 1
      %p62 = por %p60, %p61
      %p63 = scmp.ne.s32.totalorder %s54, %s55
      %p64 = scmp.eq.s32.totalorder %s23, 0
      %p65 = por %p63, %p64
      %p66 = scmp.ne.s32.totalorder %s54, %s55
      %p67 = scmp.eq.s32.totalorder %s24, 1
      %p68 = por %p66, %p67
      %p70 = scmp.ne.s32.totalorder %s55, %s69
      %p71 = scmp.eq.s32.totalorder %s24, 0
      %p72 = por %p70, %p71
      %s74 = sadd.s32 %s73, 1
      %p77 = scmp.eq.s32.totalorder %s18, 1
      %p78 = scmp.ne.s32.totalorder %s73, %s75
      %p79 = scmp.eq.s32.totalorder %s18, 0
      %p80 = por %p78, %p79
      %p81 = scmp.ne.s32.totalorder %s73, %s75
      %p82 = scmp.eq.s32.totalorder %s23, 1
      %p83 = por %p81, %p82
      %p84 = scmp.ne.s32.totalorder %s75, %s76
      %p85 = scmp.eq.s32.totalorder %s23, 0
      %p86 = por %p84, %p85
      %p87 = scmp.ne.s32.totalorder %s75, %s76
      %p88 = scmp.eq.s32.totalorder %s24, 1
      %p89 = por %p87, %p88
      %p91 = scmp.ne.s32.totalorder %s76, %s90
      %p92 = scmp.eq.s32.totalorder %s24, 0
      %p93 = por %p91, %p92
      %s95 = sadd.s32 %s94, 1
      %p98 = scmp.eq.s32.totalorder %s18, 1
      %p99 = scmp.ne.s32.totalorder %s94, %s96
      %p100 = scmp.eq.s32.totalorder %s18, 0
      %p101 = por %p99, %p100
      %p102 = scmp.ne.s32.totalorder %s94, %s96
      %p103 = scmp.eq.s32.totalorder %s23, 1
      %p104 = por %p102, %p103
      %p105 = scmp.ne.s32.totalorder %s96, %s97
      %p106 = scmp.eq.s32.totalorder %s23, 0
      %p107 = por %p105, %p106
      %p108 = scmp.ne.s32.totalorder %s96, %s97
      %p109 = scmp.eq.s32.totalorder %s24, 1
      %p110 = por %p108, %p109
      %p112 = scmp.ne.s32.totalorder %s97, %s111
      %p113 = scmp.eq.s32.totalorder %s24, 0
      %p114 = por %p112, %p113
      %s116 = sadd.s32 %s115, 1
      %p119 = scmp.eq.s32.totalorder %s18, 1
      %p120 = scmp.ne.s32.totalorder %s115, %s117
      %p121 = scmp.eq.s32.totalorder %s18, 0
      %p122 = por %p120, %p121
      %p123 = scmp.ne.s32.totalorder %s115, %s117
      %p124 = scmp.eq.s32.totalorder %s23, 1
      %p125 = por %p123, %p124
      %p126 = scmp.ne.s32.totalorder %s117, %s118
      %p127 = scmp.eq.s32.totalorder %s23, 0
      %p128 = por %p126, %p127
      %p129 = scmp.ne.s32.totalorder %s117, %s118
      %p130 = scmp.eq.s32.totalorder %s24, 1
      %p131 = por %p129, %p130
      %p133 = scmp.ne.s32.totalorder %s118, %s132
      %p134 = scmp.eq.s32.totalorder %s24, 0
      %p135 = por %p133, %p134
      %s136 = ssub.s32 %s18, %s25
      %p137 = scmp.eq.s32.totalorder %s136, 0
      %s139 = sadd.s32 %s138, 1
      %s140 = scalar_select %p137, %s138, %s139
      %p143 = pneg %p137
      %p144 = scmp.eq.s32.totalorder %s18, 1
      %p145 = por %p143, %p144
      %p146 = scmp.ne.s32.totalorder %s138, %s141
      %p147 = scmp.eq.s32.totalorder %s18, 0
      %p148 = por %p146, %p147
      %p149 = scmp.ne.s32.totalorder %s138, %s141
      %p150 = scmp.eq.s32.totalorder %s23, 1
      %p151 = por %p149, %p150
      %p152 = scmp.ne.s32.totalorder %s141, %s142
      %p153 = scmp.eq.s32.totalorder %s23, 0
      %p154 = por %p152, %p153
      %p155 = scmp.ne.s32.totalorder %s141, %s142
      %p156 = scmp.eq.s32.totalorder %s24, 1
      %p157 = por %p155, %p156
      %p159 = scmp.ne.s32.totalorder %s142, %s158
      %p160 = scmp.eq.s32.totalorder %s24, 0
      %p161 = por %p159, %p160
      %p162 = scmp.le.s32.totalorder 1, %s18
      %p163 = scmp.lt.s32.totalorder %s18, 3
      %p164 = pnand %p162, %p163
      %p165 = pneg %p164
      // Predicated region
      $region9: #{tpu_custom_call.1} parent=5 // pred_check
        _
      $region10: #{tpu_custom_call.1} parent=5 // pred_check_branch
        %167 = sbr.rel (%p164) target = $region12
      $region11: #{tpu_custom_call.1} parent=5 // pred_region
        %s168 = ssub.s32 %s18, 1
        // Predicated region
        $region13: #{tpu_custom_call.1} parent=11 // pred_check
          %p169 = pneg %p65
        $region14: #{tpu_custom_call.1} parent=11 // pred_check_branch
          %171 = sbr.rel (%p169) target = $region16
        $region15: #{tpu_custom_call.1} parent=11 // pred_region
          %s173 = ssub.s32 2048, 2048
          %174 = vsyncadd [#allocation6], %s173
          %s175 = sshll.u32 [#allocation5], 4
          %s176 = int_to_ptr.vmem [resolvable:$true] %s175
          %181 = dma.hbm_to_vmem [thread:$0]  %s1, 2048, %s176, [#allocation6], 128, 128, 8
        $region16: #{tpu_custom_call.1} parent=11 // pred_fallthru
          _
        // Predicated region
        $region17: #{tpu_custom_call.1} parent=11 // pred_check
          %p182 = pneg %p86
        $region18: #{tpu_custom_call.1} parent=11 // pred_check_branch
          %184 = sbr.rel (%p182) target = $region20
        $region19: #{tpu_custom_call.1} parent=11 // pred_region
          _
        $region20: #{tpu_custom_call.1} parent=11 // pred_fallthru
          _
        // Predicated region
        $region21: #{tpu_custom_call.1} parent=11 // pred_check
          %p185 = pneg %p107
        $region22: #{tpu_custom_call.1} parent=11 // pred_check_branch
          %187 = sbr.rel (%p185) target = $region24
        $region23: #{tpu_custom_call.1} parent=11 // pred_region
          _
        $region24: #{tpu_custom_call.1} parent=11 // pred_fallthru
          _
        // Predicated region
        $region25: #{tpu_custom_call.1} parent=11 // pred_check
          %p188 = pneg %p128
        $region26: #{tpu_custom_call.1} parent=11 // pred_check_branch
          %190 = sbr.rel (%p188) target = $region28
        $region27: #{tpu_custom_call.1} parent=11 // pred_region
          _
        $region28: #{tpu_custom_call.1} parent=11 // pred_fallthru
          _
      $region12: #{tpu_custom_call.1} parent=5 // pred_fallthru
        _
      %p191 = scmp.lt.s32.totalorder %s18, 2
      // Predicated region
      $region29: #{tpu_custom_call.1} parent=5 // pred_check
        %p192 = pneg %p191
      $region30: #{tpu_custom_call.1} parent=5 // pred_check_branch
        %194 = sbr.rel (%p192) target = $region32
      $region31: #{tpu_custom_call.1} parent=5 // pred_region
        // Predicated region
        $region33: #{tpu_custom_call.1} parent=31 // pred_check
          %p195 = pneg %p38
        $region34: #{tpu_custom_call.1} parent=31 // pred_check_branch
          %197 = sbr.rel (%p195) target = $region36
        $region35: #{tpu_custom_call.1} parent=31 // pred_region
          %s198 = sand.u32 %s28, 1
          %s199 = scalar_lea.sflag [#allocation3], %s198
          %s200 = sand.u32 %s28, 1
          %s201 = smul.addr %s200, 8
          %s202 = scalar_lea.vmem [#allocation2], %s201
          %s204 = ssub.s32 128, 128
          %205 = vsyncadd %s199, %s204
          %s206 = smul.addr %s18, 128
          %s207 = scalar_lea.hbm %s0, %s206
          %s209 = sshll.u32 %s202, 4
          %s210 = int_to_ptr.vmem [resolvable:$true] %s209
          %212 = dma.hbm_to_vmem [thread:$0]  %s207, 128, %s210, %s199
        $region36: #{tpu_custom_call.1} parent=31 // pred_fallthru
          _
      $region32: #{tpu_custom_call.1} parent=5 // pred_fallthru
        _
      %p213 = scmp.le.s32.totalorder 1, %s18
      %p214 = scmp.lt.s32.totalorder %s18, 3
      %p215 = pnand %p213, %p214
      %p216 = pneg %p215
      // Predicated region
      $region37: #{tpu_custom_call.1} parent=5 // pred_check
        _
      $region38: #{tpu_custom_call.1} parent=5 // pred_check_branch
        %218 = sbr.rel (%p215) target = $region40
      $region39: #{tpu_custom_call.1} parent=5 // pred_region
        %s219 = ssub.s32 %s18, 1
        %s220 = sand.u32 %s31, 1
        %s221 = scalar_lea.sflag [#allocation3], %s220
        %s222 = sand.u32 %s31, 1
        %s223 = smul.addr %s222, 8
        %s224 = scalar_lea.vmem [#allocation2], %s223
        // Predicated region
        $region41: #{tpu_custom_call.1} parent=39 // pred_check
          %p225 = pneg %p44
        $region42: #{tpu_custom_call.1} parent=39 // pred_check_branch
          %227 = sbr.rel (%p225) target = $region44
        $region43: #{tpu_custom_call.1} parent=39 // pred_region
          %228 = dma.done %s221, 128
        $region44: #{tpu_custom_call.1} parent=39 // pred_fallthru
          _
        // Predicated region
        $region45: #{tpu_custom_call.1} parent=39 // pred_check
          %p229 = pneg %p65
        $region46: #{tpu_custom_call.1} parent=39 // pred_check_branch
          %231 = sbr.rel (%p229) target = $region48
        $region47: #{tpu_custom_call.1} parent=39 // pred_region
          %232 = dma.done [#allocation6], 2048
        $region48: #{tpu_custom_call.1} parent=39 // pred_fallthru
          _
        %s233 = sand.u32 %s31, 1
        %s234 = scalar_lea.sflag [#allocation3], %s233
        %s235 = sand.u32 %s31, 1
        %s236 = smul.addr %s235, 8
        %s237 = scalar_lea.vmem [#allocation2], %s236
        %p238 = pneg %p44
        %p239 = pneg %p41
        %p240 = pneg %p65
        %p241 = pneg %p62
        %p242 = pneg %p86
        %p243 = pneg %p83
        %p244 = pneg %p107
        %p245 = pneg %p104
        %p246 = pneg %p128
        %p247 = pneg %p125
        %p248 = pneg %p154
        %p249 = pneg %p151
        %s250 = sand.u32 %s141, 1
        %s251 = scalar_lea.sflag [#allocation4], %s250
        %s252 = sand.u32 %s141, 1
        %s253 = smul.addr %s252, 8
        %s254 = scalar_lea.vmem [#allocation7], %s253
        %v255 = vld [vmem:[%s224] sm:$0xff]
        %v256 = vld [vmem:[#allocation5] sm:$0xff]
        %v257 = vld [vmem:[#allocation5 + $0x8] sm:$0xff]
        %v258 = vld [vmem:[#allocation5 + $0x10] sm:$0xff]
        %v259 = vld [vmem:[#allocation5 + $0x18] sm:$0xff]
        %v260 = vld [vmem:[#allocation5 + $0x20] sm:$0xff]
        %v261 = vld [vmem:[#allocation5 + $0x28] sm:$0xff]
        %v262 = vld [vmem:[#allocation5 + $0x30] sm:$0xff]
        %v263 = vld [vmem:[#allocation5 + $0x38] sm:$0xff]
        %v264 = vld [vmem:[#allocation5 + $0x40] sm:$0xff]
        %v265 = vld [vmem:[#allocation5 + $0x48] sm:$0xff]
        %v266 = vld [vmem:[#allocation5 + $0x50] sm:$0xff]
        %v267 = vld [vmem:[#allocation5 + $0x58] sm:$0xff]
        %v268 = vld [vmem:[#allocation5 + $0x60] sm:$0xff]
        %v269 = vld [vmem:[#allocation5 + $0x68] sm:$0xff]
        %v270 = vld [vmem:[#allocation5 + $0x70] sm:$0xff]
        %v271 = vld [vmem:[#allocation5 + $0x78] sm:$0xff]
        %272 = vmatprep.subr.mxu0 0.0
        %273 = vmatpush1.msra.mxu0 %v256
        %274 = vmatprep.subr.mxu0 0.0
        %275 = vmatpush1.msra.mxu0 %v257
        %276 = vmatprep.subr.mxu0 0.0
        %277 = vmatpush1.msra.mxu0 %v258
        %278 = vmatprep.subr.mxu0 0.0
        %279 = vmatpush1.msra.mxu0 %v259
        %280 = vmatprep.subr.mxu0 0.0
        %281 = vmatpush1.msra.mxu0 %v260
        %282 = vmatprep.subr.mxu0 0.0
        %283 = vmatpush1.msra.mxu0 %v261
        %284 = vmatprep.subr.mxu0 0.0
        %285 = vmatpush1.msra.mxu0 %v262
        %286 = vmatprep.subr.mxu0 0.0
        %287 = vmatpush1.msra.mxu0 %v263
        %288 = vmatprep.subr.mxu0 0.0
        %289 = vmatpush1.msra.mxu0 %v264
        %290 = vmatprep.subr.mxu0 0.0
        %291 = vmatpush1.msra.mxu0 %v265
        %292 = vmatprep.subr.mxu0 0.0
        %293 = vmatpush1.msra.mxu0 %v266
        %294 = vmatprep.subr.mxu0 0.0
        %295 = vmatpush1.msra.mxu0 %v267
        %296 = vmatprep.subr.mxu0 0.0
        %297 = vmatpush1.msra.mxu0 %v268
        %298 = vmatprep.subr.mxu0 0.0
        %299 = vmatpush1.msra.mxu0 %v269
        %300 = vmatprep.subr.mxu0 0.0
        %301 = vmatpush1.msra.mxu0 %v270
        %302 = vmatprep.subr.mxu0 0.0
        %303 = vmatpush1.msra.mxu0 %v271
        %304 = vmatprep.subr.mxu0 0.0
        %305 = vmatpush1.msra.mxu0 0.0
        %306 = vmatprep.subr.mxu0 0.0
        %307 = vmatpush1.msra.mxu0 0.0
        %308 = vmatprep.subr.mxu0 0.0
        %309 = vmatpush1.msra.mxu0 0.0
        %310 = vmatprep.subr.mxu0 0.0
        %311 = vmatpush1.msra.mxu0 0.0
        %312 = vmatprep.subr.mxu0 0.0
        %313 = vmatpush1.msra.mxu0 0.0
        %314 = vmatprep.subr.mxu0 0.0
        %315 = vmatpush1.msra.mxu0 0.0
        %316 = vmatprep.subr.mxu0 0.0
        %317 = vmatpush1.msra.mxu0 0.0
        %318 = vmatprep.subr.mxu0 0.0
        %319 = vmatpush1.msra.mxu0 0.0
        %320 = vmatprep.subr.mxu0 0.0
        %321 = vmatpush1.msra.mxu0 0.0
        %322 = vmatprep.subr.mxu0 0.0
        %323 = vmatpush1.msra.mxu0 0.0
        %324 = vmatprep.subr.mxu0 0.0
        %325 = vmatpush1.msra.mxu0 0.0
        %326 = vmatprep.subr.mxu0 0.0
        %327 = vmatpush1.msra.mxu0 0.0
        %328 = vmatprep.subr.mxu0 0.0
        %329 = vmatpush1.msra.mxu0 0.0
        %330 = vmatprep.subr.mxu0 0.0
        %331 = vmatpush1.msra.mxu0 0.0
        %332 = vmatprep.subr.mxu0 0.0
        %333 = vmatpush1.msra.mxu0 0.0
        %334 = vmatprep.subr.mxu0 0.0
        %335 = vmatpush1.msra.mxu0 0.0
        %336 = vmatprep.mubr.f32.mxu0 0.0
        %337 = vmatmul.mubr.f32.gmra.mrb[0].mxu0 %v255
        %v338 = vpop.f32.mrb[0].mxu0
        %v339 = vadd.f32 0.0, %v338
        %v340 = vpop.f32.mrb[0].mxu0
        %341 = vdwg.mxu0
        %v342 = vadd.f32 %v255, %v339
        %v343 = vld [vmem:[%s2] sm:$0x1]
        %v345 = vlaneseq
        %v346 = vshrl.u32 %v345, 7
        %v347 = vsub.s32 0, %v346
        %v348 = vrot.slane %v343, %v347
        %v350 = vadd.f32 %v342, %v348
        %351 = vadd.xlane.f32.xlu0 %v350
        %v352 = vpop.xlane.xlu0 %351
        %v353 = vrcp.pop 128.0
        %v354 = vmul.f32 %v352, %v353
        %v355 = vsub.f32 %v350, %v354
        %v356 = vmul.f32 %v355, %v355
        %357 = vadd.xlane.f32.xlu0 %v356
        %v358 = vpop.xlane.xlu0 %357
        %v359 = vmul.f32 %v358, %v353
        %v360 = vadd.f32 %v359, 1e-05
        %v361 = vrsqrt.pop %v360
        %v362 = vmul.f32 %v355, %v361
        %v363 = vld [vmem:[%s3] sm:$0x1]
        %v365 = vlaneseq
        %v366 = vshrl.u32 %v365, 7
        %v367 = vsub.s32 0, %v366
        %v368 = vrot.slane %v363, %v367
        %v370 = vmul.f32 %v362, %v368
        %v371 = vld [vmem:[%s4] sm:$0x1]
        %v373 = vlaneseq
        %v374 = vshrl.u32 %v373, 7
        %v375 = vsub.s32 0, %v374
        %v376 = vrot.slane %v371, %v375
        %v378 = vadd.f32 %v370, %v376
        %379 = vst [vmem:[%s254] sm:$0xff] %v378
        %s380 = sand.u32 %s141, 1
        %s381 = scalar_lea.sflag [#allocation4], %s380
        %s382 = sand.u32 %s141, 1
        %s383 = smul.addr %s382, 8
        %s384 = scalar_lea.vmem [#allocation7], %s383
        // Predicated region
        $region49: #{tpu_custom_call.1} parent=39 // pred_check
          %p385 = pneg %p151
        $region50: #{tpu_custom_call.1} parent=39 // pred_check_branch
          %387 = sbr.rel (%p385) target = $region52
        $region51: #{tpu_custom_call.1} parent=39 // pred_region
          %s389 = ssub.s32 128, 128
          %390 = vsyncadd %s381, %s389
          %s391 = smul.addr %s23, 128
          %s392 = scalar_lea.hbm %s5, %s391
          %s394 = sshll.u32 %s384, 4
          %s395 = int_to_ptr.vmem [resolvable:$true] %s394
          %397 = dma.vmem_to_hbm [thread:$0]  %s395, 128, %s392, %s381
        $region52: #{tpu_custom_call.1} parent=39 // pred_fallthru
          _
      $region40: #{tpu_custom_call.1} parent=5 // pred_fallthru
        _
      %p398 = scmp.le.s32.totalorder 2, %s18
      // Predicated region
      $region53: #{tpu_custom_call.1} parent=5 // pred_check
        %p399 = pneg %p398
      $region54: #{tpu_custom_call.1} parent=5 // pred_check_branch
        %401 = sbr.rel (%p399) target = $region56
      $region55: #{tpu_custom_call.1} parent=5 // pred_region
        %s402 = ssub.s32 %s18, 2
        // Predicated region
        $region57: #{tpu_custom_call.1} parent=55 // pred_check
          %p403 = pneg %p157
        $region58: #{tpu_custom_call.1} parent=55 // pred_check_branch
          %405 = sbr.rel (%p403) target = $region60
        $region59: #{tpu_custom_call.1} parent=55 // pred_region
          %s406 = sand.u32 %s142, 1
          %s407 = scalar_lea.sflag [#allocation4], %s406
          %s408 = sand.u32 %s142, 1
          %s409 = smul.addr %s408, 8
          %s410 = scalar_lea.vmem [#allocation7], %s409
          %411 = dma.done %s407, 128
        $region60: #{tpu_custom_call.1} parent=55 // pred_fallthru
          _
      $region56: #{tpu_custom_call.1} parent=5 // pred_fallthru
        _
    $region6: #{tpu_custom_call.1} parent=1 // loop_footer
      %s22 = sadd.s32 1, %s18
    $region7: #{tpu_custom_call.1} parent=1 // loop_footer_branch
      %17 = sbr.rel target = $region3
    $region8: #{tpu_custom_call.1} parent=1 // loop_exit
      _
    %412 = vsyncpa [#allocation3], 1
    %s413 = scalar_lea.sflag [#allocation3], 1
    %414 = vsyncpa %s413, 1
    %415 = vsyncpa [#allocation6], 1
    %416 = vsyncpa [#allocation4], 1
    %s417 = scalar_lea.sflag [#allocation4], 1
    %418 = vsyncpa %s417, 1

</llo_original>
